<compile_context>
chip_gen: v7x
topology: tpu7x:2x2x1
jax: 0.10.0
libtpu: 0.0.40
codegen_flags: <defaults>
</compile_context>

<pallas_src>
import functools

import jax
import jax.numpy as jnp
import numpy as np
from jax.experimental import pallas as pl
from jax.experimental.pallas import tpu as pltpu

EPS = 1e-5  # nn.InstanceNorm2d default eps (affine=False, no running stats)


def _banded_weights(w, W, C):
    """Fold the 3x3 conv's channel contraction, horizontal taps and horizontal
    ReflectionPad2d(1) into a (3*W*C, W*C) matrix (ky-major row blocks), so the
    conv becomes one lane-dense (Nb*H, 3*W*C) x (3*W*C, W*C) matmul against the
    vertically row-padded im2row slab."""
    sel = np.zeros((3, W, W), np.float32)            # sel[kx, x_in, x_out]
    for kx in range(3):
        for xo in range(W):
            xi = xo + kx - 1
            if xi < 0:
                xi = 1                               # reflect left edge
            elif xi >= W:
                xi = W - 2                           # reflect right edge
            sel[kx, xi, xo] += 1.0
    sel = jnp.asarray(sel)
    # w: (ky, kx, cin, cout) HWIO  ->  wb[ky, x_in*C + cin, x_out*C + cout]
    wb = jnp.einsum("kio,ykcd->yicod", sel, w)
    return wb.reshape(3 * W * C, W * C)


def _resnet_block_kernel(x_ref, wb1_ref, wb2_ref, out_ref, xp_ref, *,
                         C, inv_npix):
    nb, H, WC = out_ref.shape

    def pad_im2row(img_f32):
        # Write the three vertically shifted (reflection-padded) copies of the
        # sample block side by side in the lane dimension, as bf16.
        img = img_f32.astype(jnp.bfloat16)
        xp_ref[:, :, WC:2 * WC] = img                          # ky=1 (center)
        xp_ref[:, 1:, 0:WC] = img[:, :H - 1, :]                # ky=0 (row above)
        xp_ref[:, 0:1, 0:WC] = img[:, 1:2, :]                  #   top reflect
        xp_ref[:, :H - 1, 2 * WC:3 * WC] = img[:, 1:, :]       # ky=2 (row below)
        xp_ref[:, H - 1:H, 2 * WC:3 * WC] = img[:, H - 2:H - 1, :]  # bottom refl.

    def channel_pool(rows):
        # Recursive-doubling roll-and-add over the W positions of each channel
        # (lanes are w*C + c, so shifts that are multiples of C stay in-channel).
        s = rows
        shift = C
        while shift < WC:
            s = s + pltpu.roll(s, shift, axis=1)
            shift *= 2
        return s * inv_npix                                    # fold 1/(H*W)

    def conv_instnorm(img, wb_ref):
        pad_im2row(img)
        # 3x3 conv == ONE lane-dense bf16 matmul, f32 accumulation.
        acc = jnp.dot(xp_ref[...].reshape(nb * H, 3 * WC), wb_ref[...],
                      preferred_element_type=jnp.float32)
        acc = acc.reshape(nb, H, WC)
        # InstanceNorm2d (affine=False); conv bias omitted (cancelled exactly
        # by the mean subtraction).  One-pass sum / sum-of-squares, f32 stats.
        rs = jnp.sum(acc, axis=1)                              # (nb, WC)
        rq = jnp.sum(acc * acc, axis=1)                        # (nb, WC)
        stats = channel_pool(jnp.concatenate([rs, rq], axis=0))
        mean = stats[:nb]                                      # (nb, WC)
        var = stats[nb:] - mean * mean
        inv = jax.lax.rsqrt(var + EPS)
        return (acc - mean[:, None, :]) * inv[:, None, :]

    x = x_ref[...]                                             # (nb, H, WC) f32
    h = jnp.maximum(conv_instnorm(x, wb1_ref), 0.0)            # stage 1 + ReLU
    out_ref[...] = (x + conv_instnorm(h, wb2_ref)).astype(out_ref.dtype)


@jax.jit
def resnet_block_forward(x_nchw, w1, b1, w2, b2):
    """x_nchw: (N, C, H, W) f32; w*: (3, 3, C, C) HWIO; b*: (C,).
    Biases unused: a per-channel conv bias is cancelled exactly by
    InstanceNorm's per-channel mean subtraction (affine=False)."""
    del b1, b2
    N, C, H, W = x_nchw.shape
    WC = W * C
    # Kernel is shape-specialized: lane-dense slab and roll-tree pooling.
    assert WC % 128 == 0, "W*C must be a multiple of 128 (lane-dense slab)"
    assert W & (W - 1) == 0 and W >= 1, "W must be a power of two (roll tree)"
    assert H >= 2 and W >= 2, "ReflectionPad2d(1) needs H, W >= 2"

    x = jnp.transpose(x_nchw, (0, 2, 3, 1)).reshape(N, H, WC)   # lane-dense
    wb1 = _banded_weights(w1, W, C).astype(jnp.bfloat16)        # (3*WC, WC)
    wb2 = _banded_weights(w2, W, C).astype(jnp.bfloat16)

    # Batch blocking: small batches -> one grid step (avoid per-step overhead);
    # larger even batches -> 2 grid steps so v7x's two TensorCores both work.
    if N >= 4 and N % 2 == 0:
        nb = N // 2
    else:
        nb = N
    steps = N // nb

    kernel = functools.partial(_resnet_block_kernel, C=C, inv_npix=1.0 / (H * W))
    img_spec = pl.BlockSpec((nb, H, WC), lambda i: (i, 0, 0))
    w_spec = pl.BlockSpec((3 * WC, WC), lambda i: (0, 0))       # grid-invariant

    flops = int(2 * 2 * N * H * (3 * WC) * WC)                  # two conv stages
    bytes_accessed = int(2 * N * H * WC * 4 + 2 * (3 * WC * WC * 2))
    transcendentals = int(2 * 2 * N * WC)                       # rsqrt lanes

    out = pl.pallas_call(
        kernel,
        out_shape=jax.ShapeDtypeStruct((N, H, WC), jnp.float32),
        grid_spec=pltpu.PrefetchScalarGridSpec(
            num_scalar_prefetch=0,
            grid=(steps,),
            in_specs=[
                img_spec,   # x block
                w_spec,     # banded w1 (bf16)
                w_spec,     # banded w2 (bf16)
            ],
            out_specs=img_spec,
            scratch_shapes=[pltpu.VMEM((nb, H, 3 * WC), jnp.bfloat16)],
        ),
        compiler_params=pltpu.CompilerParams(
            dimension_semantics=("parallel",),
        ),
        cost_estimate=pl.CostEstimate(
            flops=flops,
            transcendentals=transcendentals,
            bytes_accessed=bytes_accessed,
        ),
    )(x, wb1, wb2)

    return jnp.transpose(out.reshape(N, H, W, C), (0, 3, 1, 2))   # back to NCHW


def _reference_forward(x_nchw, w1, b1, w2, b2):
    """Pure-JAX f32 reference mirroring the PyTorch module (NCHW, HIGHEST)."""
    def conv(y, w, b):
        yp = jnp.pad(y, ((0, 0), (0, 0), (1, 1), (1, 1)), mode="reflect")
        z = jax.lax.conv_general_dilated(
            yp, w, (1, 1), "VALID",
            dimension_numbers=("NCHW", "HWIO", "NCHW"),
            precision=jax.lax.Precision.HIGHEST)
        return z + b[None, :, None, None]

    def inorm(z):
        m = jnp.mean(z, axis=(2, 3), keepdims=True)
        v = jnp.mean((z - m) ** 2, axis=(2, 3), keepdims=True)
        return (z - m) / jnp.sqrt(v + EPS)

    h = jax.nn.relu(inorm(conv(x_nchw, w1, b1)))
    return x_nchw + inorm(conv(h, w2, b2))


if __name__ == "__main__":
    N, C, H, W = 2, 8, 16, 16          # dim = 8; W*C = 128 lanes exactly
    key = jax.random.PRNGKey(0)
    kx, kw1, kb1, kw2, kb2 = jax.random.split(key, 5)

    x = jax.random.normal(kx, (N, C, H, W), dtype=jnp.float32)
    # Deterministic synthetic parameters (Conv2d(dim, dim, 3, bias=True) x2), HWIO.
    w1 = 0.1 * jax.random.normal(kw1, (3, 3, C, C), dtype=jnp.float32)
    b1 = 0.1 * jax.random.normal(kb1, (C,), dtype=jnp.float32)
    w2 = 0.1 * jax.random.normal(kw2, (3, 3, C, C), dtype=jnp.float32)
    b2 = 0.1 * jax.random.normal(kb2, (C,), dtype=jnp.float32)

    out = jax.block_until_ready(resnet_block_forward(x, w1, b1, w2, b2))
    ref = jax.block_until_ready(_reference_forward(x, w1, b1, w2, b2))

    max_err = float(jnp.max(jnp.abs(out - ref)))
    assert out.shape == (N, C, H, W) and out.dtype == jnp.float32
    # Kernel uses bf16 MXU operands with f32 accumulation; expected deviation
    # vs. the f32-HIGHEST reference is O(1e-2) worst case.
    assert max_err < 5e-2, f"mismatch vs reference: {max_err}"

    print("KERNEL_OK")
</pallas_src>

<mosaic_0001>
module attributes {stable_mosaic.version = 11 : i64} {
  func.func @_resnet_block_kernel(%arg0: i32, %arg1: memref<2x16x128xf32, #tpu.memory_space<vmem>>, %arg2: memref<384x128xbf16, #tpu.memory_space<vmem>>, %arg3: memref<384x128xbf16, #tpu.memory_space<vmem>>, %arg4: memref<2x16x128xf32, #tpu.memory_space<vmem>>, %arg5: memref<2x16x384xbf16, #tpu.memory_space<vmem>>) attributes {dimension_semantics = [#tpu.dimension_semantics<parallel>], iteration_bounds = array<i64: 1>, scalar_prefetch = 0 : i64, scratch_operands = 1 : i64, tpu.core_type = #tpu.core_type<tc>, window_params = [{transform_indices = @transform_0, window_bounds = array<i64: 2, 16, 128>}, {pipeline_mode = #tpu.pipeline_mode<synchronous>, transform_indices = @transform_1, window_bounds = array<i64: 384, 128>}, {pipeline_mode = #tpu.pipeline_mode<synchronous>, transform_indices = @transform_2, window_bounds = array<i64: 384, 128>}, {transform_indices = @transform_3, window_bounds = array<i64: 2, 16, 128>}]} {
    %c0 = arith.constant 0 : index
    %c0_0 = arith.constant 0 : index
    %c0_1 = arith.constant 0 : index
    %0 = vector.load %arg1[%c0, %c0_0, %c0_1] : memref<2x16x128xf32, #tpu.memory_space<vmem>>, vector<2x16x128xf32>
    %1 = arith.truncf %0 : vector<2x16x128xf32> to vector<2x16x128xbf16>
    %c0_2 = arith.constant 0 : index
    %c0_3 = arith.constant 0 : index
    %c128 = arith.constant 128 : index
    %2 = vector.load %arg5[%c0_2, %c0_3, %c128] : memref<2x16x384xbf16, #tpu.memory_space<vmem>>, vector<2x16x128xbf16>
    tpu.vector_store %arg5[%c0_2, %c0_3, %c128], %1 {strides = array<i32>} : memref<2x16x384xbf16, #tpu.memory_space<vmem>>, vector<2x16x128xbf16>,
    %3 = vector.extract_strided_slice %1 {offsets = [0, 0, 0], sizes = [2, 15, 128], strides = [1, 1, 1]} : vector<2x16x128xbf16> to vector<2x15x128xbf16>
    %c0_4 = arith.constant 0 : index
    %c1 = arith.constant 1 : index
    %c0_5 = arith.constant 0 : index
    %4 = vector.load %arg5[%c0_4, %c1, %c0_5] : memref<2x16x384xbf16, #tpu.memory_space<vmem>>, vector<2x15x128xbf16>
    tpu.vector_store %arg5[%c0_4, %c1, %c0_5], %3 {strides = array<i32>} : memref<2x16x384xbf16, #tpu.memory_space<vmem>>, vector<2x15x128xbf16>,
    %5 = vector.extract_strided_slice %1 {offsets = [0, 1, 0], sizes = [2, 1, 128], strides = [1, 1, 1]} : vector<2x16x128xbf16> to vector<2x1x128xbf16>
    %c0_6 = arith.constant 0 : index
    %c0_7 = arith.constant 0 : index
    %c0_8 = arith.constant 0 : index
    %6 = vector.load %arg5[%c0_6, %c0_7, %c0_8] : memref<2x16x384xbf16, #tpu.memory_space<vmem>>, vector<2x1x128xbf16>
    tpu.vector_store %arg5[%c0_6, %c0_7, %c0_8], %5 {strides = array<i32>} : memref<2x16x384xbf16, #tpu.memory_space<vmem>>, vector<2x1x128xbf16>,
    %7 = vector.extract_strided_slice %1 {offsets = [0, 1, 0], sizes = [2, 15, 128], strides = [1, 1, 1]} : vector<2x16x128xbf16> to vector<2x15x128xbf16>
    %c0_9 = arith.constant 0 : index
    %c0_10 = arith.constant 0 : index
    %c256 = arith.constant 256 : index
    %8 = vector.load %arg5[%c0_9, %c0_10, %c256] : memref<2x16x384xbf16, #tpu.memory_space<vmem>>, vector<2x15x128xbf16>
    tpu.vector_store %arg5[%c0_9, %c0_10, %c256], %7 {strides = array<i32>} : memref<2x16x384xbf16, #tpu.memory_space<vmem>>, vector<2x15x128xbf16>,
    %9 = vector.extract_strided_slice %1 {offsets = [0, 14, 0], sizes = [2, 1, 128], strides = [1, 1, 1]} : vector<2x16x128xbf16> to vector<2x1x128xbf16>
    %c0_11 = arith.constant 0 : index
    %c15 = arith.constant 15 : index
    %c256_12 = arith.constant 256 : index
    %10 = vector.load %arg5[%c0_11, %c15, %c256_12] : memref<2x16x384xbf16, #tpu.memory_space<vmem>>, vector<2x1x128xbf16>
    tpu.vector_store %arg5[%c0_11, %c15, %c256_12], %9 {strides = array<i32>} : memref<2x16x384xbf16, #tpu.memory_space<vmem>>, vector<2x1x128xbf16>,
    %c0_13 = arith.constant 0 : index
    %c0_14 = arith.constant 0 : index
    %c0_15 = arith.constant 0 : index
    %11 = vector.load %arg5[%c0_13, %c0_14, %c0_15] : memref<2x16x384xbf16, #tpu.memory_space<vmem>>, vector<2x16x384xbf16>
    %12 = vector.shape_cast %11 : vector<2x16x384xbf16> to vector<32x384xbf16>
    %c0_16 = arith.constant 0 : index
    %c0_17 = arith.constant 0 : index
    %13 = vector.load %arg2[%c0_16, %c0_17] : memref<384x128xbf16, #tpu.memory_space<vmem>>, vector<384x128xbf16>
    %cst = arith.constant dense<0.000000e+00> : vector<32x128xf32>
    %14 = tpu.matmul %12, %13, %cst {dimension_numbers = #tpu.dot_dimension_numbers<[1], [0], [0], [1], [0, 0, 1, 1], [], []>} : vector<32x384xbf16>, vector<384x128xbf16>, vector<32x128xf32> -> vector<32x128xf32>
    %15 = vector.shape_cast %14 : vector<32x128xf32> to vector<2x16x128xf32>
    %cst_18 = arith.constant dense<0.000000e+00> : vector<2x128xf32>
    %16 = vector.multi_reduction <add>, %15, %cst_18 [1] : vector<2x16x128xf32> to vector<2x128xf32>
    %17 = arith.mulf %15, %15 : vector<2x16x128xf32>
    %cst_19 = arith.constant dense<0.000000e+00> : vector<2x128xf32>
    %18 = vector.multi_reduction <add>, %17, %cst_19 [1] : vector<2x16x128xf32> to vector<2x128xf32>
    %19 = tpu.concatenate %16, %18 in 0 : vector<2x128xf32>, vector<2x128xf32> -> vector<4x128xf32>
    %c8_i32 = arith.constant 8 : i32
    %20 = tpu.dynamic_rotate %19 by %c8_i32 dim 1 : vector<4x128xf32>, i32 -> vector<4x128xf32>
    %21 = arith.addf %19, %20 : vector<4x128xf32>
    %c16_i32 = arith.constant 16 : i32
    %22 = tpu.dynamic_rotate %21 by %c16_i32 dim 1 : vector<4x128xf32>, i32 -> vector<4x128xf32>
    %23 = arith.addf %21, %22 : vector<4x128xf32>
    %c32_i32 = arith.constant 32 : i32
    %24 = tpu.dynamic_rotate %23 by %c32_i32 dim 1 : vector<4x128xf32>, i32 -> vector<4x128xf32>
    %25 = arith.addf %23, %24 : vector<4x128xf32>
    %c64_i32 = arith.constant 64 : i32
    %26 = tpu.dynamic_rotate %25 by %c64_i32 dim 1 : vector<4x128xf32>, i32 -> vector<4x128xf32>
    %27 = arith.addf %25, %26 : vector<4x128xf32>
    %cst_20 = arith.constant 3.906250e-03 : f32
    %28 = vector.broadcast %cst_20 : f32 to vector<4x128xf32>
    %29 = arith.mulf %27, %28 : vector<4x128xf32>
    %30 = vector.extract_strided_slice %29 {offsets = [0, 0], sizes = [2, 128], strides = [1, 1]} : vector<4x128xf32> to vector<2x128xf32>
    %31 = vector.extract_strided_slice %29 {offsets = [2, 0], sizes = [2, 128], strides = [1, 1]} : vector<4x128xf32> to vector<2x128xf32>
    %32 = arith.mulf %30, %30 : vector<2x128xf32>
    %33 = arith.subf %31, %32 : vector<2x128xf32>
    %cst_21 = arith.constant 9.99999974E-6 : f32
    %34 = vector.broadcast %cst_21 : f32 to vector<2x128xf32>
    %35 = arith.addf %33, %34 : vector<2x128xf32>
    %36 = math.rsqrt %35 : vector<2x128xf32>
    %37 = vector.shape_cast %30 : vector<2x128xf32> to vector<2x1x128xf32>
    %38 = vector.broadcast %37 : vector<2x1x128xf32> to vector<2x16x128xf32>
    %39 = arith.subf %15, %38 : vector<2x16x128xf32>
    %40 = vector.shape_cast %36 : vector<2x128xf32> to vector<2x1x128xf32>
    %41 = vector.broadcast %40 : vector<2x1x128xf32> to vector<2x16x128xf32>
    %42 = arith.mulf %39, %41 : vector<2x16x128xf32>
    %cst_22 = arith.constant 0.000000e+00 : f32
    %43 = vector.broadcast %cst_22 : f32 to vector<2x16x128xf32>
    %44 = arith.maximumf %42, %43 : vector<2x16x128xf32>
    %45 = arith.truncf %44 : vector<2x16x128xf32> to vector<2x16x128xbf16>
    %c0_23 = arith.constant 0 : index
    %c0_24 = arith.constant 0 : index
    %c128_25 = arith.constant 128 : index
    %46 = vector.load %arg5[%c0_23, %c0_24, %c128_25] : memref<2x16x384xbf16, #tpu.memory_space<vmem>>, vector<2x16x128xbf16>
    tpu.vector_store %arg5[%c0_23, %c0_24, %c128_25], %45 {strides = array<i32>} : memref<2x16x384xbf16, #tpu.memory_space<vmem>>, vector<2x16x128xbf16>,
    %47 = vector.extract_strided_slice %45 {offsets = [0, 0, 0], sizes = [2, 15, 128], strides = [1, 1, 1]} : vector<2x16x128xbf16> to vector<2x15x128xbf16>
    %c0_26 = arith.constant 0 : index
    %c1_27 = arith.constant 1 : index
    %c0_28 = arith.constant 0 : index
    %48 = vector.load %arg5[%c0_26, %c1_27, %c0_28] : memref<2x16x384xbf16, #tpu.memory_space<vmem>>, vector<2x15x128xbf16>
    tpu.vector_store %arg5[%c0_26, %c1_27, %c0_28], %47 {strides = array<i32>} : memref<2x16x384xbf16, #tpu.memory_space<vmem>>, vector<2x15x128xbf16>,
    %49 = vector.extract_strided_slice %45 {offsets = [0, 1, 0], sizes = [2, 1, 128], strides = [1, 1, 1]} : vector<2x16x128xbf16> to vector<2x1x128xbf16>
    %c0_29 = arith.constant 0 : index
    %c0_30 = arith.constant 0 : index
    %c0_31 = arith.constant 0 : index
    %50 = vector.load %arg5[%c0_29, %c0_30, %c0_31] : memref<2x16x384xbf16, #tpu.memory_space<vmem>>, vector<2x1x128xbf16>
    tpu.vector_store %arg5[%c0_29, %c0_30, %c0_31], %49 {strides = array<i32>} : memref<2x16x384xbf16, #tpu.memory_space<vmem>>, vector<2x1x128xbf16>,
    %51 = vector.extract_strided_slice %45 {offsets = [0, 1, 0], sizes = [2, 15, 128], strides = [1, 1, 1]} : vector<2x16x128xbf16> to vector<2x15x128xbf16>
    %c0_32 = arith.constant 0 : index
    %c0_33 = arith.constant 0 : index
    %c256_34 = arith.constant 256 : index
    %52 = vector.load %arg5[%c0_32, %c0_33, %c256_34] : memref<2x16x384xbf16, #tpu.memory_space<vmem>>, vector<2x15x128xbf16>
    tpu.vector_store %arg5[%c0_32, %c0_33, %c256_34], %51 {strides = array<i32>} : memref<2x16x384xbf16, #tpu.memory_space<vmem>>, vector<2x15x128xbf16>,
    %53 = vector.extract_strided_slice %45 {offsets = [0, 14, 0], sizes = [2, 1, 128], strides = [1, 1, 1]} : vector<2x16x128xbf16> to vector<2x1x128xbf16>
    %c0_35 = arith.constant 0 : index
    %c15_36 = arith.constant 15 : index
    %c256_37 = arith.constant 256 : index
    %54 = vector.load %arg5[%c0_35, %c15_36, %c256_37] : memref<2x16x384xbf16, #tpu.memory_space<vmem>>, vector<2x1x128xbf16>
    tpu.vector_store %arg5[%c0_35, %c15_36, %c256_37], %53 {strides = array<i32>} : memref<2x16x384xbf16, #tpu.memory_space<vmem>>, vector<2x1x128xbf16>,
    %c0_38 = arith.constant 0 : index
    %c0_39 = arith.constant 0 : index
    %c0_40 = arith.constant 0 : index
    %55 = vector.load %arg5[%c0_38, %c0_39, %c0_40] : memref<2x16x384xbf16, #tpu.memory_space<vmem>>, vector<2x16x384xbf16>
    %56 = vector.shape_cast %55 : vector<2x16x384xbf16> to vector<32x384xbf16>
    %c0_41 = arith.constant 0 : index
    %c0_42 = arith.constant 0 : index
    %57 = vector.load %arg3[%c0_41, %c0_42] : memref<384x128xbf16, #tpu.memory_space<vmem>>, vector<384x128xbf16>
    %cst_43 = arith.constant dense<0.000000e+00> : vector<32x128xf32>
    %58 = tpu.matmul %56, %57, %cst_43 {dimension_numbers = #tpu.dot_dimension_numbers<[1], [0], [0], [1], [0, 0, 1, 1], [], []>} : vector<32x384xbf16>, vector<384x128xbf16>, vector<32x128xf32> -> vector<32x128xf32>
    %59 = vector.shape_cast %58 : vector<32x128xf32> to vector<2x16x128xf32>
    %cst_44 = arith.constant dense<0.000000e+00> : vector<2x128xf32>
    %60 = vector.multi_reduction <add>, %59, %cst_44 [1] : vector<2x16x128xf32> to vector<2x128xf32>
    %61 = arith.mulf %59, %59 : vector<2x16x128xf32>
    %cst_45 = arith.constant dense<0.000000e+00> : vector<2x128xf32>
    %62 = vector.multi_reduction <add>, %61, %cst_45 [1] : vector<2x16x128xf32> to vector<2x128xf32>
    %63 = tpu.concatenate %60, %62 in 0 : vector<2x128xf32>, vector<2x128xf32> -> vector<4x128xf32>
    %c8_i32_46 = arith.constant 8 : i32
    %64 = tpu.dynamic_rotate %63 by %c8_i32_46 dim 1 : vector<4x128xf32>, i32 -> vector<4x128xf32>
    %65 = arith.addf %63, %64 : vector<4x128xf32>
    %c16_i32_47 = arith.constant 16 : i32
    %66 = tpu.dynamic_rotate %65 by %c16_i32_47 dim 1 : vector<4x128xf32>, i32 -> vector<4x128xf32>
    %67 = arith.addf %65, %66 : vector<4x128xf32>
    %c32_i32_48 = arith.constant 32 : i32
    %68 = tpu.dynamic_rotate %67 by %c32_i32_48 dim 1 : vector<4x128xf32>, i32 -> vector<4x128xf32>
    %69 = arith.addf %67, %68 : vector<4x128xf32>
    %c64_i32_49 = arith.constant 64 : i32
    %70 = tpu.dynamic_rotate %69 by %c64_i32_49 dim 1 : vector<4x128xf32>, i32 -> vector<4x128xf32>
    %71 = arith.addf %69, %70 : vector<4x128xf32>
    %cst_50 = arith.constant 3.906250e-03 : f32
    %72 = vector.broadcast %cst_50 : f32 to vector<4x128xf32>
    %73 = arith.mulf %71, %72 : vector<4x128xf32>
    %74 = vector.extract_strided_slice %73 {offsets = [0, 0], sizes = [2, 128], strides = [1, 1]} : vector<4x128xf32> to vector<2x128xf32>
    %75 = vector.extract_strided_slice %73 {offsets = [2, 0], sizes = [2, 128], strides = [1, 1]} : vector<4x128xf32> to vector<2x128xf32>
    %76 = arith.mulf %74, %74 : vector<2x128xf32>
    %77 = arith.subf %75, %76 : vector<2x128xf32>
    %cst_51 = arith.constant 9.99999974E-6 : f32
    %78 = vector.broadcast %cst_51 : f32 to vector<2x128xf32>
    %79 = arith.addf %77, %78 : vector<2x128xf32>
    %80 = math.rsqrt %79 : vector<2x128xf32>
    %81 = vector.shape_cast %74 : vector<2x128xf32> to vector<2x1x128xf32>
    %82 = vector.broadcast %81 : vector<2x1x128xf32> to vector<2x16x128xf32>
    %83 = arith.subf %59, %82 : vector<2x16x128xf32>
    %84 = vector.shape_cast %80 : vector<2x128xf32> to vector<2x1x128xf32>
    %85 = vector.broadcast %84 : vector<2x1x128xf32> to vector<2x16x128xf32>
    %86 = arith.mulf %83, %85 : vector<2x16x128xf32>
    %87 = arith.addf %0, %86 : vector<2x16x128xf32>
    %c0_52 = arith.constant 0 : index
    %c0_53 = arith.constant 0 : index
    %c0_54 = arith.constant 0 : index
    %88 = vector.load %arg4[%c0_52, %c0_53, %c0_54] : memref<2x16x128xf32, #tpu.memory_space<vmem>>, vector<2x16x128xf32>
    tpu.vector_store %arg4[%c0_52, %c0_53, %c0_54], %87 {strides = array<i32>} : memref<2x16x128xf32, #tpu.memory_space<vmem>>, vector<2x16x128xf32>,
    return
  }
  func.func @transform_0(%arg0: i32) -> (i32, i32, i32) {
    %c0_i32 = arith.constant 0 : i32
    %c0_i32_0 = arith.constant 0 : i32
    %c0_i32_1 = arith.constant 0 : i32
    return %arg0, %c0_i32, %c0_i32_0 : i32, i32, i32
  }
  func.func @transform_1(%arg0: i32) -> (i32, i32) {
    %c0_i32 = arith.constant 0 : i32
    %c0_i32_0 = arith.constant 0 : i32
    %c0_i32_1 = arith.constant 0 : i32
    return %c0_i32, %c0_i32_0 : i32, i32
  }
  func.func @transform_2(%arg0: i32) -> (i32, i32) {
    %c0_i32 = arith.constant 0 : i32
    %c0_i32_0 = arith.constant 0 : i32
    %c0_i32_1 = arith.constant 0 : i32
    return %c0_i32, %c0_i32_0 : i32, i32
  }
  func.func @transform_3(%arg0: i32) -> (i32, i32, i32) {
    %c0_i32 = arith.constant 0 : i32
    %c0_i32_0 = arith.constant 0 : i32
    %c0_i32_1 = arith.constant 0 : i32
    return %arg0, %c0_i32, %c0_i32_0 : i32, i32, i32
  }
}

</mosaic_0001>

<llo_original>
// kernel: resnet_block_forward.1
$region0: #{resnet_block_forward.1}
  #allocation0 [shape = 'u32[]', space=smem, size = 0x4, offset = 0x4, fixed_abs, tag = 'smem constant byte address 0x4 - core index']
  #allocation1 [shape = 'u32[144,128]{1,0:T(1,128)}', space=vmem, size = 0x12000, scoped, tag = 'internal scratch']
  #allocation2 [shape = 'bf16[2,16,384]{2,1,0:T(16,128)(2,1)}', space=vmem, size = 0x6000, scoped, tag = 'scratch operand']
  %s0 = inlined_call_operand.vmem [shape: f32[2,16,128], index: 0, kind: input, shape index: {}]
  %s1 = inlined_call_operand.vmem [shape: bf16[384,128], index: 1, kind: input, shape index: {}]
  %s2 = inlined_call_operand.vmem [shape: bf16[384,128], index: 2, kind: input, shape index: {}]
  %s3 = inlined_call_operand.vmem [shape: f32[2,16,128], index: 3, kind: output, shape index: {}]
  %s4 = sld [smem:[#allocation0]]
  $region22: #{resnet_block_forward.1} parent=0
    _
  %s6 = ssub.s32 1, %s4
  %s7 = scalar_select 0, %s6, %s4
  // Predicated region
  $region2: #{resnet_block_forward.1} parent=0 // pred_check
    _
  $region3: #{resnet_block_forward.1} parent=0 // pred_check_branch
    %9 = sbr.rel (0) target = $region5
  $region4: #{resnet_block_forward.1} parent=0 // pred_region
    _
  $region5: #{resnet_block_forward.1} parent=0 // pred_fallthru
    _
  // Predicated region
  $region6: #{resnet_block_forward.1} parent=0 // pred_check
    _
  $region7: #{resnet_block_forward.1} parent=0 // pred_check_branch
    %11 = sbr.rel (0) target = $region9
  $region8: #{resnet_block_forward.1} parent=0 // pred_region
    _
  $region9: #{resnet_block_forward.1} parent=0 // pred_fallthru
    _
  // Predicated region
  $region10: #{resnet_block_forward.1} parent=0 // pred_check
    _
  $region11: #{resnet_block_forward.1} parent=0 // pred_check_branch
    %13 = sbr.rel (0) target = $region13
  $region12: #{resnet_block_forward.1} parent=0 // pred_region
    _
  $region13: #{resnet_block_forward.1} parent=0 // pred_fallthru
    _
  %v15 = vld [vmem:[%s0] sm:$0xff]
  %v16 = vld [vmem:[%s0 + $0x8] sm:$0xff]
  %v17 = vld [vmem:[%s0 + $0x10] sm:$0xff]
  %v18 = vld [vmem:[%s0 + $0x18] sm:$0xff]
  %v19 = vpack.c.bf16 %v16, %v15
  %v20 = vpack.c.bf16 %v18, %v17
  %21 = vst [vmem:[#allocation2 + $0x8] sm:$0xff] %v19
  %22 = vst [vmem:[#allocation2 + $0x20] sm:$0xff] %v20
  %v24 = vshrl.u32 %v19, 16
  %v26 = vrot.slane %v24, 7
  %v27 = vshll.u32 %v19, 16
  %v29 = vor.u32 %v26, %v27
  %v31 = vshrl.u32 %v20, 16
  %v33 = vrot.slane %v31, 7
  %v34 = vshll.u32 %v20, 16
  %v36 = vor.u32 %v33, %v34
  %vm39 = vcmask 1047552
  %vm40 = vsmask.f32 7938
  %vm41 = vmand %vm39, %vm40
  %v42 = vld [vmem:[#allocation2] sm:$0xff]
  %v43 = vsel %vm41, %v29, %v42
  %44 = vst [vmem:[#allocation2] sm:$0xff] %v43
  %v45 = vld [vmem:[#allocation2 + $0x18] sm:$0xff]
  %v46 = vsel %vm41, %v36, %v45
  %47 = vst [vmem:[#allocation2 + $0x18] sm:$0xff] %v46
  %vm50 = vcmask 1040384
  %vm51 = vsmask.f32 256
  %vm52 = vmand %vm50, %vm51
  %v53 = vld [vmem:[#allocation2] sm:$0x1]
  %v54 = vsel %vm52, %v24, %v53
  %55 = vst [vmem:[#allocation2] sm:$0x1] %v54
  %v56 = vld [vmem:[#allocation2 + $0x18] sm:$0x1]
  %v57 = vsel %vm52, %v31, %v56
  %58 = vst [vmem:[#allocation2 + $0x18] sm:$0x1] %v57
  %v59 = vrot.slane %v27, 1
  %v60 = vor.u32 %v24, %v59
  %v61 = vrot.slane %v34, 1
  %v62 = vor.u32 %v31, %v61
  %vm65 = vsmask.f32 7424
  %vm66 = vmand %vm39, %vm65
  %v67 = vld [vmem:[#allocation2 + $0x10] sm:$0xff]
  %v68 = vsel %vm66, %v60, %v67
  %69 = vst [vmem:[#allocation2 + $0x10] sm:$0xff] %v68
  %v70 = vld [vmem:[#allocation2 + $0x28] sm:$0xff]
  %v71 = vsel %vm66, %v62, %v70
  %72 = vst [vmem:[#allocation2 + $0x28] sm:$0xff] %v71
  %vm75 = vcmask 1047559
  %vm76 = vsmask.f32 7966
  %vm77 = vmand %vm75, %vm76
  %v78 = vld [vmem:[#allocation2 + $0x10] sm:$0x80]
  %v79 = vsel %vm77, %v27, %v78
  %80 = vst [vmem:[#allocation2 + $0x10] sm:$0x80] %v79
  %v81 = vld [vmem:[#allocation2 + $0x28] sm:$0x80]
  %v82 = vsel %vm77, %v34, %v81
  %83 = vst [vmem:[#allocation2 + $0x28] sm:$0x80] %v82
  %v84 = vld [vmem:[#allocation2] sm:$0xff]
  %v85 = vld [vmem:[#allocation2 + $0x8] sm:$0xff]
  %v86 = vld [vmem:[#allocation2 + $0x10] sm:$0xff]
  %v87 = vld [vmem:[#allocation2 + $0x18] sm:$0xff]
  %v88 = vld [vmem:[#allocation2 + $0x20] sm:$0xff]
  %v89 = vld [vmem:[#allocation2 + $0x28] sm:$0xff]
  %v90 = vld [vmem:[%s1] sm:$0xf]
  %v91 = vld [vmem:[%s1 + $0x4] sm:$0xf]
  %v92 = vld [vmem:[%s1 + $0x8] sm:$0xf]
  %v93 = vld [vmem:[%s1 + $0xc] sm:$0xf]
  %v94 = vld [vmem:[%s1 + $0x10] sm:$0xf]
  %v95 = vld [vmem:[%s1 + $0x14] sm:$0xf]
  %v96 = vld [vmem:[%s1 + $0x18] sm:$0xf]
  %v97 = vld [vmem:[%s1 + $0x1c] sm:$0xf]
  %v98 = vld [vmem:[%s1 + $0x20] sm:$0xf]
  %v99 = vld [vmem:[%s1 + $0x24] sm:$0xf]
  %v100 = vld [vmem:[%s1 + $0x28] sm:$0xf]
  %v101 = vld [vmem:[%s1 + $0x2c] sm:$0xf]
  %v102 = vld [vmem:[%s1 + $0x30] sm:$0xf]
  %v103 = vld [vmem:[%s1 + $0x34] sm:$0xf]
  %v104 = vld [vmem:[%s1 + $0x38] sm:$0xf]
  %v105 = vld [vmem:[%s1 + $0x3c] sm:$0xf]
  %v106 = vld [vmem:[%s1 + $0x40] sm:$0xf]
  %v107 = vld [vmem:[%s1 + $0x44] sm:$0xf]
  %v108 = vld [vmem:[%s1 + $0x48] sm:$0xf]
  %v109 = vld [vmem:[%s1 + $0x4c] sm:$0xf]
  %v110 = vld [vmem:[%s1 + $0x50] sm:$0xf]
  %v111 = vld [vmem:[%s1 + $0x54] sm:$0xf]
  %v112 = vld [vmem:[%s1 + $0x58] sm:$0xf]
  %v113 = vld [vmem:[%s1 + $0x5c] sm:$0xf]
  %v114 = vld [vmem:[%s1 + $0x60] sm:$0xf]
  %v115 = vld [vmem:[%s1 + $0x64] sm:$0xf]
  %v116 = vld [vmem:[%s1 + $0x68] sm:$0xf]
  %v117 = vld [vmem:[%s1 + $0x6c] sm:$0xf]
  %v118 = vld [vmem:[%s1 + $0x70] sm:$0xf]
  %v119 = vld [vmem:[%s1 + $0x74] sm:$0xf]
  %v120 = vld [vmem:[%s1 + $0x78] sm:$0xf]
  %v121 = vld [vmem:[%s1 + $0x7c] sm:$0xf]
  %v122 = vld [vmem:[%s1 + $0x80] sm:$0xf]
  %v123 = vld [vmem:[%s1 + $0x84] sm:$0xf]
  %v124 = vld [vmem:[%s1 + $0x88] sm:$0xf]
  %v125 = vld [vmem:[%s1 + $0x8c] sm:$0xf]
  %v126 = vld [vmem:[%s1 + $0x90] sm:$0xf]
  %v127 = vld [vmem:[%s1 + $0x94] sm:$0xf]
  %v128 = vld [vmem:[%s1 + $0x98] sm:$0xf]
  %v129 = vld [vmem:[%s1 + $0x9c] sm:$0xf]
  %v130 = vld [vmem:[%s1 + $0xa0] sm:$0xf]
  %v131 = vld [vmem:[%s1 + $0xa4] sm:$0xf]
  %v132 = vld [vmem:[%s1 + $0xa8] sm:$0xf]
  %v133 = vld [vmem:[%s1 + $0xac] sm:$0xf]
  %v134 = vld [vmem:[%s1 + $0xb0] sm:$0xf]
  %v135 = vld [vmem:[%s1 + $0xb4] sm:$0xf]
  %v136 = vld [vmem:[%s1 + $0xb8] sm:$0xf]
  %v137 = vld [vmem:[%s1 + $0xbc] sm:$0xf]
  %v186 = vunpack.c.l.b16 %v90
  %v187 = vunpack.c.l.b16 %v91
  %v188 = vunpack.c.l.b16 %v92
  %v189 = vunpack.c.l.b16 %v93
  %v190 = vunpack.c.l.b16 %v94
  %v191 = vunpack.c.l.b16 %v95
  %v192 = vunpack.c.l.b16 %v96
  %v193 = vunpack.c.l.b16 %v97
  %v194 = vunpack.c.l.b16 %v98
  %v195 = vunpack.c.l.b16 %v99
  %v196 = vunpack.c.l.b16 %v100
  %v197 = vunpack.c.l.b16 %v101
  %v198 = vunpack.c.l.b16 %v102
  %v199 = vunpack.c.l.b16 %v103
  %v200 = vunpack.c.l.b16 %v104
  %v201 = vunpack.c.l.b16 %v105
  %v202 = vunpack.c.l.b16 %v106
  %v203 = vunpack.c.l.b16 %v107
  %v204 = vunpack.c.l.b16 %v108
  %v205 = vunpack.c.l.b16 %v109
  %v206 = vunpack.c.l.b16 %v110
  %v207 = vunpack.c.l.b16 %v111
  %v208 = vunpack.c.l.b16 %v112
  %v209 = vunpack.c.l.b16 %v113
  %v210 = vunpack.c.l.b16 %v114
  %v211 = vunpack.c.l.b16 %v115
  %v212 = vunpack.c.l.b16 %v116
  %v213 = vunpack.c.l.b16 %v117
  %v214 = vunpack.c.l.b16 %v118
  %v215 = vunpack.c.l.b16 %v119
  %v216 = vunpack.c.l.b16 %v120
  %v217 = vunpack.c.l.b16 %v121
  %v218 = vunpack.c.l.b16 %v122
  %v219 = vunpack.c.l.b16 %v123
  %v220 = vunpack.c.l.b16 %v124
  %v221 = vunpack.c.l.b16 %v125
  %v222 = vunpack.c.l.b16 %v126
  %v223 = vunpack.c.l.b16 %v127
  %v224 = vunpack.c.l.b16 %v128
  %v225 = vunpack.c.l.b16 %v129
  %v226 = vunpack.c.l.b16 %v130
  %v227 = vunpack.c.l.b16 %v131
  %v228 = vunpack.c.l.b16 %v132
  %v229 = vunpack.c.l.b16 %v133
  %v230 = vunpack.c.l.b16 %v134
  %v231 = vunpack.c.l.b16 %v135
  %v232 = vunpack.c.l.b16 %v136
  %v233 = vunpack.c.l.b16 %v137
  %v234 = vpack.c.b16 %v187, %v186
  %v235 = vpack.c.b16 %v189, %v188
  %v236 = vpack.c.b16 %v191, %v190
  %v237 = vpack.c.b16 %v193, %v192
  %v238 = vpack.c.b16 %v195, %v194
  %v239 = vpack.c.b16 %v197, %v196
  %v240 = vpack.c.b16 %v199, %v198
  %v241 = vpack.c.b16 %v201, %v200
  %v242 = vpack.c.b16 %v203, %v202
  %v243 = vpack.c.b16 %v205, %v204
  %v244 = vpack.c.b16 %v207, %v206
  %v245 = vpack.c.b16 %v209, %v208
  %v246 = vpack.c.b16 %v211, %v210
  %v247 = vpack.c.b16 %v213, %v212
  %v248 = vpack.c.b16 %v215, %v214
  %v249 = vpack.c.b16 %v217, %v216
  %v250 = vpack.c.b16 %v219, %v218
  %v251 = vpack.c.b16 %v221, %v220
  %v252 = vpack.c.b16 %v223, %v222
  %v253 = vpack.c.b16 %v225, %v224
  %v254 = vpack.c.b16 %v227, %v226
  %v255 = vpack.c.b16 %v229, %v228
  %v256 = vpack.c.b16 %v231, %v230
  %v257 = vpack.c.b16 %v233, %v232
  %282 = vmatprep.subr.bf16.mxu0 0
  %283 = vmatpush1.bf16.msra.mxu0 %v234
  %284 = vmatprep.subr.bf16.mxu0 0
  %285 = vmatpush1.bf16.msra.mxu0 %v235
  %286 = vmatprep.subr.bf16.mxu0 0
  %287 = vmatpush1.bf16.msra.mxu0 %v236
  %288 = vmatprep.subr.bf16.mxu0 0
  %289 = vmatpush1.bf16.msra.mxu0 %v237
  %290 = vmatprep.subr.bf16.mxu0 0
  %291 = vmatpush1.bf16.msra.mxu0 %v238
  %292 = vmatprep.subr.bf16.mxu0 0
  %293 = vmatpush1.bf16.msra.mxu0 %v239
  %294 = vmatprep.subr.bf16.mxu0 0
  %295 = vmatpush1.bf16.msra.mxu0 %v240
  %296 = vmatprep.subr.bf16.mxu0 0
  %297 = vmatpush1.bf16.msra.mxu0 %v241
  %298 = vmatprep.subr.bf16.mxu0 0
  %299 = vmatpush1.bf16.msra.mxu0 %v242
  %300 = vmatprep.subr.bf16.mxu0 0
  %301 = vmatpush1.bf16.msra.mxu0 %v243
  %302 = vmatprep.subr.bf16.mxu0 0
  %303 = vmatpush1.bf16.msra.mxu0 %v244
  %304 = vmatprep.subr.bf16.mxu0 0
  %305 = vmatpush1.bf16.msra.mxu0 %v245
  %306 = vmatprep.subr.bf16.mxu0 0
  %307 = vmatpush1.bf16.msra.mxu0 %v246
  %308 = vmatprep.subr.bf16.mxu0 0
  %309 = vmatpush1.bf16.msra.mxu0 %v247
  %310 = vmatprep.subr.bf16.mxu0 0
  %311 = vmatpush1.bf16.msra.mxu0 %v248
  %312 = vmatprep.subr.bf16.mxu0 0
  %313 = vmatpush1.bf16.msra.mxu0 %v249
  %314 = vmatprep.mubr.bf16.mxu0 %v85
  %315 = vmatmul.mubr.bf16.gmra.mrb[0].mxu0 %v84
  %v316 = vpop.f32.mrb[0].mxu0
  %v317 = vadd.f32 0.0, %v316
  %v318 = vpop.f32.mrb[0].mxu0
  %v319 = vpop.f32.mrb[0].mxu0
  %v320 = vadd.f32 0.0, %v319
  %v321 = vpop.f32.mrb[0].mxu0
  %322 = vmatprep.mubr.bf16.mxu0 %v88
  %323 = vmatmul.mubr.bf16.gmra.mrb[0].mxu0 %v87
  %v324 = vpop.f32.mrb[0].mxu0
  %v325 = vadd.f32 0.0, %v324
  %v326 = vpop.f32.mrb[0].mxu0
  %v327 = vpop.f32.mrb[0].mxu0
  %v328 = vadd.f32 0.0, %v327
  %v329 = vpop.f32.mrb[0].mxu0
  %330 = vdwg.mxu0
  %331 = vmatprep.subr.bf16.mxu0 0
  %332 = vmatpush1.bf16.msra.mxu0 %v250
  %333 = vmatprep.subr.bf16.mxu0 0
  %334 = vmatpush1.bf16.msra.mxu0 %v251
  %335 = vmatprep.subr.bf16.mxu0 0
  %336 = vmatpush1.bf16.msra.mxu0 %v252
  %337 = vmatprep.subr.bf16.mxu0 0
  %338 = vmatpush1.bf16.msra.mxu0 %v253
  %339 = vmatprep.subr.bf16.mxu0 0
  %340 = vmatpush1.bf16.msra.mxu0 %v254
  %341 = vmatprep.subr.bf16.mxu0 0
  %342 = vmatpush1.bf16.msra.mxu0 %v255
  %343 = vmatprep.subr.bf16.mxu0 0
  %344 = vmatpush1.bf16.msra.mxu0 %v256
  %345 = vmatprep.subr.bf16.mxu0 0
  %346 = vmatpush1.bf16.msra.mxu0 %v257
  %347 = vmatprep.subr.bf16.mxu0 0
  %348 = vmatpush1.bf16.msra.mxu0 0
  %349 = vmatprep.subr.bf16.mxu0 0
  %350 = vmatpush1.bf16.msra.mxu0 0
  %351 = vmatprep.subr.bf16.mxu0 0
  %352 = vmatpush1.bf16.msra.mxu0 0
  %353 = vmatprep.subr.bf16.mxu0 0
  %354 = vmatpush1.bf16.msra.mxu0 0
  %355 = vmatprep.subr.bf16.mxu0 0
  %356 = vmatpush1.bf16.msra.mxu0 0
  %357 = vmatprep.subr.bf16.mxu0 0
  %358 = vmatpush1.bf16.msra.mxu0 0
  %359 = vmatprep.subr.bf16.mxu0 0
  %360 = vmatpush1.bf16.msra.mxu0 0
  %361 = vmatprep.subr.bf16.mxu0 0
  %362 = vmatpush1.bf16.msra.mxu0 0
  %363 = vmatprep.mubr.bf16.mxu0 0
  %364 = vmatmul.mubr.bf16.gmra.mrb[0].mxu0 %v86
  %v365 = vpop.f32.mrb[0].mxu0
  %v366 = vadd.f32 %v317, %v365
  %v367 = vpop.f32.mrb[0].mxu0
  %v368 = vpop.f32.mrb[0].mxu0
  %v369 = vadd.f32 %v320, %v368
  %v370 = vpop.f32.mrb[0].mxu0
  %371 = vmatprep.mubr.bf16.mxu0 0
  %372 = vmatmul.mubr.bf16.gmra.mrb[0].mxu0 %v89
  %v373 = vpop.f32.mrb[0].mxu0
  %v374 = vadd.f32 %v325, %v373
  %v375 = vpop.f32.mrb[0].mxu0
  %v376 = vpop.f32.mrb[0].mxu0
  %v377 = vadd.f32 %v328, %v376
  %v378 = vpop.f32.mrb[0].mxu0
  %379 = vdwg.mxu0
  %v380 = vadd.f32 %v366, %v369
  %v381 = vrot.slane %v380, 4
  %v382 = vadd.f32 %v380, %v381
  %v383 = vrot.slane %v382, 2
  %v384 = vadd.f32 %v382, %v383
  %v385 = vrot.slane %v384, 1
  %v386 = vadd.f32 %v384, %v385
  %v387 = vadd.f32 %v374, %v377
  %v388 = vrot.slane %v387, 4
  %v389 = vadd.f32 %v387, %v388
  %v390 = vrot.slane %v389, 2
  %v391 = vadd.f32 %v389, %v390
  %v392 = vrot.slane %v391, 1
  %v393 = vadd.f32 %v391, %v392
  %v394 = vmul.f32 %v366, %v366
  %v395 = vmul.f32 %v369, %v369
  %v396 = vmul.f32 %v374, %v374
  %v397 = vmul.f32 %v377, %v377
  %v398 = vadd.f32 %v394, %v395
  %v399 = vrot.slane %v398, 4
  %v400 = vadd.f32 %v398, %v399
  %v401 = vrot.slane %v400, 2
  %v402 = vadd.f32 %v400, %v401
  %v403 = vrot.slane %v402, 1
  %v404 = vadd.f32 %v402, %v403
  %v405 = vadd.f32 %v396, %v397
  %v406 = vrot.slane %v405, 4
  %v407 = vadd.f32 %v405, %v406
  %v408 = vrot.slane %v407, 2
  %v409 = vadd.f32 %v407, %v408
  %v410 = vrot.slane %v409, 1
  %v411 = vadd.f32 %v409, %v410
  %vm414 = vcmask 1041409
  %v415 = vsel %vm414, %v393, %v386
  %vm419 = vcmask 1043459
  %v420 = vsel %vm419, %v411, %v404
  %vm422 = vcmask 1041408
  %v423 = vsel %vm422, %v415, %v420
  %424 = vrot.lane.b32.xlu0 %v423, 8
  %v425 = vpop.permute.xlu0 %424
  %v426 = vadd.f32 %v423, %v425
  %427 = vrot.lane.b32.xlu0 %v426, 16
  %v428 = vpop.permute.xlu0 %427
  %v429 = vadd.f32 %v426, %v428
  %430 = vrot.lane.b32.xlu0 %v429, 32
  %v431 = vpop.permute.xlu0 %430
  %v432 = vadd.f32 %v429, %v431
  %433 = vrot.lane.b32.xlu0 %v432, 64
  %v434 = vpop.permute.xlu0 %433
  %v435 = vadd.f32 %v432, %v434
  %v436 = vmul.f32 %v435, 0.00390625
  %v437 = vmul.f32 %v436, %v436
  %v439 = vrot.slane %v437, 6
  %v441 = vsub.f32 %v436, %v439
  %v442 = vadd.f32 %v441, 1e-05
  %v443 = vrsqrt.pop %v442
  %v446 = vunpack.c.l.s4 1966171168
  %v447 = vunpack.c.0.s8 %v446
  %v448 = vlaneseq
  %v449 = vshrl.u32 %v448, 7
  %v450 = vsub.s32 %v447, %v449
  %v451 = vrot.slane %v436, %v450
  %v452 = vcombine.high %v451, %v451
  %v454 = vunpack.c.l.s4 1966171168
  %v455 = vunpack.c.0.s8 %v454
  %v456 = vlaneseq
  %v457 = vshrl.u32 %v456, 7
  %v458 = vsub.s32 %v455, %v457
  %v459 = vrot.slane %v451, %v458
  %v461 = vunpack.c.l.s4 1966171168
  %v462 = vunpack.c.0.s8 %v461
  %v463 = vlaneseq
  %v464 = vshrl.u32 %v463, 7
  %v465 = vsub.s32 %v462, %v464
  %v466 = vrot.slane %v452, %v465
  %v467 = vlaneseq
  %v468 = vshrl.u32 %v467, 7
  %v469 = vsub.s32 0, %v468
  %v470 = vrot.slane %v459, %v469
  %v471 = vlaneseq
  %v472 = vshrl.u32 %v471, 7
  %v473 = vsub.s32 0, %v472
  %v474 = vrot.slane %v466, %v473
  %v477 = vsub.f32 %v366, %v470
  %v478 = vsub.f32 %v369, %v470
  %v479 = vsub.f32 %v374, %v474
  %v480 = vsub.f32 %v377, %v474
  %v483 = vunpack.c.l.s4 1966171168
  %v484 = vunpack.c.0.s8 %v483
  %v485 = vlaneseq
  %v486 = vshrl.u32 %v485, 7
  %v487 = vsub.s32 %v484, %v486
  %v488 = vrot.slane %v443, %v487
  %v489 = vcombine.high %v488, %v488
  %v491 = vunpack.c.l.s4 1966171168
  %v492 = vunpack.c.0.s8 %v491
  %v493 = vlaneseq
  %v494 = vshrl.u32 %v493, 7
  %v495 = vsub.s32 %v492, %v494
  %v496 = vrot.slane %v488, %v495
  %v498 = vunpack.c.l.s4 1966171168
  %v499 = vunpack.c.0.s8 %v498
  %v500 = vlaneseq
  %v501 = vshrl.u32 %v500, 7
  %v502 = vsub.s32 %v499, %v501
  %v503 = vrot.slane %v489, %v502
  %v504 = vcombine.high %v496, %v496
  %v505 = vcombine.high %v503, %v503
  %v506 = vlaneseq
  %v507 = vshrl.u32 %v506, 7
  %v508 = vsub.s32 0, %v507
  %v509 = vrot.slane %v504, %v508
  %v510 = vlaneseq
  %v511 = vshrl.u32 %v510, 7
  %v512 = vsub.s32 0, %v511
  %v513 = vrot.slane %v505, %v512
  %v516 = vmul.f32 %v477, %v509
  %v517 = vmul.f32 %v478, %v509
  %v518 = vmul.f32 %v479, %v513
  %v519 = vmul.f32 %v480, %v513
  %v520 = vmax.f32 %v516, 0.0
  %v521 = vmax.f32 %v517, 0.0
  %v522 = vmax.f32 %v518, 0.0
  %v523 = vmax.f32 %v519, 0.0
  %v524 = vpack.c.bf16 %v521, %v520
  %v525 = vpack.c.bf16 %v523, %v522
  %526 = vst [vmem:[#allocation2 + $0x8] sm:$0xff] %v524
  %527 = vst [vmem:[#allocation2 + $0x20] sm:$0xff] %v525
  %v529 = vshrl.u32 %v524, 16
  %v531 = vrot.slane %v529, 7
  %v532 = vshll.u32 %v524, 16
  %v534 = vor.u32 %v531, %v532
  %v536 = vshrl.u32 %v525, 16
  %v538 = vrot.slane %v536, 7
  %v539 = vshll.u32 %v525, 16
  %v541 = vor.u32 %v538, %v539
  %v544 = vld [vmem:[#allocation2] sm:$0xff]
  %v545 = vsel %vm41, %v534, %v544
  %546 = vst [vmem:[#allocation2] sm:$0xff] %v545
  %v547 = vld [vmem:[#allocation2 + $0x18] sm:$0xff]
  %v548 = vsel %vm41, %v541, %v547
  %549 = vst [vmem:[#allocation2 + $0x18] sm:$0xff] %v548
  %v552 = vld [vmem:[#allocation2] sm:$0x1]
  %v553 = vsel %vm52, %v529, %v552
  %554 = vst [vmem:[#allocation2] sm:$0x1] %v553
  %v555 = vld [vmem:[#allocation2 + $0x18] sm:$0x1]
  %v556 = vsel %vm52, %v536, %v555
  %557 = vst [vmem:[#allocation2 + $0x18] sm:$0x1] %v556
  %v558 = vrot.slane %v532, 1
  %v559 = vor.u32 %v529, %v558
  %v560 = vrot.slane %v539, 1
  %v561 = vor.u32 %v536, %v560
  %v564 = vld [vmem:[#allocation2 + $0x10] sm:$0xff]
  %v565 = vsel %vm66, %v559, %v564
  %566 = vst [vmem:[#allocation2 + $0x10] sm:$0xff] %v565
  %v567 = vld [vmem:[#allocation2 + $0x28] sm:$0xff]
  %v568 = vsel %vm66, %v561, %v567
  %569 = vst [vmem:[#allocation2 + $0x28] sm:$0xff] %v568
  %v572 = vld [vmem:[#allocation2 + $0x10] sm:$0x80]
  %v573 = vsel %vm77, %v532, %v572
  %574 = vst [vmem:[#allocation2 + $0x10] sm:$0x80] %v573
  %v575 = vld [vmem:[#allocation2 + $0x28] sm:$0x80]
  %v576 = vsel %vm77, %v539, %v575
  %577 = vst [vmem:[#allocation2 + $0x28] sm:$0x80] %v576
  %v578 = vld [vmem:[#allocation2] sm:$0xff]
  %v579 = vld [vmem:[#allocation2 + $0x8] sm:$0xff]
  %v580 = vld [vmem:[#allocation2 + $0x10] sm:$0xff]
  %v581 = vld [vmem:[#allocation2 + $0x18] sm:$0xff]
  %v582 = vld [vmem:[#allocation2 + $0x20] sm:$0xff]
  %v583 = vld [vmem:[#allocation2 + $0x28] sm:$0xff]
  %v584 = vld [vmem:[%s2] sm:$0xf]
  %v585 = vld [vmem:[%s2 + $0x4] sm:$0xf]
  %v586 = vld [vmem:[%s2 + $0x8] sm:$0xf]
  %v587 = vld [vmem:[%s2 + $0xc] sm:$0xf]
  %v588 = vld [vmem:[%s2 + $0x10] sm:$0xf]
  %v589 = vld [vmem:[%s2 + $0x14] sm:$0xf]
  %v590 = vld [vmem:[%s2 + $0x18] sm:$0xf]
  %v591 = vld [vmem:[%s2 + $0x1c] sm:$0xf]
  %v592 = vld [vmem:[%s2 + $0x20] sm:$0xf]
  %v593 = vld [vmem:[%s2 + $0x24] sm:$0xf]
  %v594 = vld [vmem:[%s2 + $0x28] sm:$0xf]
  %v595 = vld [vmem:[%s2 + $0x2c] sm:$0xf]
  %v596 = vld [vmem:[%s2 + $0x30] sm:$0xf]
  %v597 = vld [vmem:[%s2 + $0x34] sm:$0xf]
  %v598 = vld [vmem:[%s2 + $0x38] sm:$0xf]
  %v599 = vld [vmem:[%s2 + $0x3c] sm:$0xf]
  %v600 = vld [vmem:[%s2 + $0x40] sm:$0xf]
  %v601 = vld [vmem:[%s2 + $0x44] sm:$0xf]
  %v602 = vld [vmem:[%s2 + $0x48] sm:$0xf]
  %v603 = vld [vmem:[%s2 + $0x4c] sm:$0xf]
  %v604 = vld [vmem:[%s2 + $0x50] sm:$0xf]
  %v605 = vld [vmem:[%s2 + $0x54] sm:$0xf]
  %v606 = vld [vmem:[%s2 + $0x58] sm:$0xf]
  %v607 = vld [vmem:[%s2 + $0x5c] sm:$0xf]
  %v608 = vld [vmem:[%s2 + $0x60] sm:$0xf]
  %v609 = vld [vmem:[%s2 + $0x64] sm:$0xf]
  %v610 = vld [vmem:[%s2 + $0x68] sm:$0xf]
  %v611 = vld [vmem:[%s2 + $0x6c] sm:$0xf]
  %v612 = vld [vmem:[%s2 + $0x70] sm:$0xf]
  %v613 = vld [vmem:[%s2 + $0x74] sm:$0xf]
  %v614 = vld [vmem:[%s2 + $0x78] sm:$0xf]
  %v615 = vld [vmem:[%s2 + $0x7c] sm:$0xf]
  %v616 = vld [vmem:[%s2 + $0x80] sm:$0xf]
  %v617 = vld [vmem:[%s2 + $0x84] sm:$0xf]
  %v618 = vld [vmem:[%s2 + $0x88] sm:$0xf]
  %v619 = vld [vmem:[%s2 + $0x8c] sm:$0xf]
  %v620 = vld [vmem:[%s2 + $0x90] sm:$0xf]
  %v621 = vld [vmem:[%s2 + $0x94] sm:$0xf]
  %v622 = vld [vmem:[%s2 + $0x98] sm:$0xf]
  %v623 = vld [vmem:[%s2 + $0x9c] sm:$0xf]
  %v624 = vld [vmem:[%s2 + $0xa0] sm:$0xf]
  %v625 = vld [vmem:[%s2 + $0xa4] sm:$0xf]
  %v626 = vld [vmem:[%s2 + $0xa8] sm:$0xf]
  %v627 = vld [vmem:[%s2 + $0xac] sm:$0xf]
  %v628 = vld [vmem:[%s2 + $0xb0] sm:$0xf]
  %v629 = vld [vmem:[%s2 + $0xb4] sm:$0xf]
  %v630 = vld [vmem:[%s2 + $0xb8] sm:$0xf]
  %v631 = vld [vmem:[%s2 + $0xbc] sm:$0xf]
  %v680 = vunpack.c.l.b16 %v584
  %v681 = vunpack.c.l.b16 %v585
  %v682 = vunpack.c.l.b16 %v586
  %v683 = vunpack.c.l.b16 %v587
  %v684 = vunpack.c.l.b16 %v588
  %v685 = vunpack.c.l.b16 %v589
  %v686 = vunpack.c.l.b16 %v590
  %v687 = vunpack.c.l.b16 %v591
  %v688 = vunpack.c.l.b16 %v592
  %v689 = vunpack.c.l.b16 %v593
  %v690 = vunpack.c.l.b16 %v594
  %v691 = vunpack.c.l.b16 %v595
  %v692 = vunpack.c.l.b16 %v596
  %v693 = vunpack.c.l.b16 %v597
  %v694 = vunpack.c.l.b16 %v598
  %v695 = vunpack.c.l.b16 %v599
  %v696 = vunpack.c.l.b16 %v600
  %v697 = vunpack.c.l.b16 %v601
  %v698 = vunpack.c.l.b16 %v602
  %v699 = vunpack.c.l.b16 %v603
  %v700 = vunpack.c.l.b16 %v604
  %v701 = vunpack.c.l.b16 %v605
  %v702 = vunpack.c.l.b16 %v606
  %v703 = vunpack.c.l.b16 %v607
  %v704 = vunpack.c.l.b16 %v608
  %v705 = vunpack.c.l.b16 %v609
  %v706 = vunpack.c.l.b16 %v610
  %v707 = vunpack.c.l.b16 %v611
  %v708 = vunpack.c.l.b16 %v612
  %v709 = vunpack.c.l.b16 %v613
  %v710 = vunpack.c.l.b16 %v614
  %v711 = vunpack.c.l.b16 %v615
  %v712 = vunpack.c.l.b16 %v616
  %v713 = vunpack.c.l.b16 %v617
  %v714 = vunpack.c.l.b16 %v618
  %v715 = vunpack.c.l.b16 %v619
  %v716 = vunpack.c.l.b16 %v620
  %v717 = vunpack.c.l.b16 %v621
  %v718 = vunpack.c.l.b16 %v622
  %v719 = vunpack.c.l.b16 %v623
  %v720 = vunpack.c.l.b16 %v624
  %v721 = vunpack.c.l.b16 %v625
  %v722 = vunpack.c.l.b16 %v626
  %v723 = vunpack.c.l.b16 %v627
  %v724 = vunpack.c.l.b16 %v628
  %v725 = vunpack.c.l.b16 %v629
  %v726 = vunpack.c.l.b16 %v630
  %v727 = vunpack.c.l.b16 %v631
  %v728 = vpack.c.b16 %v681, %v680
  %v729 = vpack.c.b16 %v683, %v682
  %v730 = vpack.c.b16 %v685, %v684
  %v731 = vpack.c.b16 %v687, %v686
  %v732 = vpack.c.b16 %v689, %v688
  %v733 = vpack.c.b16 %v691, %v690
  %v734 = vpack.c.b16 %v693, %v692
  %v735 = vpack.c.b16 %v695, %v694
  %v736 = vpack.c.b16 %v697, %v696
  %v737 = vpack.c.b16 %v699, %v698
  %v738 = vpack.c.b16 %v701, %v700
  %v739 = vpack.c.b16 %v703, %v702
  %v740 = vpack.c.b16 %v705, %v704
  %v741 = vpack.c.b16 %v707, %v706
  %v742 = vpack.c.b16 %v709, %v708
  %v743 = vpack.c.b16 %v711, %v710
  %v744 = vpack.c.b16 %v713, %v712
  %v745 = vpack.c.b16 %v715, %v714
  %v746 = vpack.c.b16 %v717, %v716
  %v747 = vpack.c.b16 %v719, %v718
  %v748 = vpack.c.b16 %v721, %v720
  %v749 = vpack.c.b16 %v723, %v722
  %v750 = vpack.c.b16 %v725, %v724
  %v751 = vpack.c.b16 %v727, %v726
  %776 = vmatprep.subr.bf16.mxu0 0
  %777 = vmatpush1.bf16.msra.mxu0 %v728
  %778 = vmatprep.subr.bf16.mxu0 0
  %779 = vmatpush1.bf16.msra.mxu0 %v729
  %780 = vmatprep.subr.bf16.mxu0 0
  %781 = vmatpush1.bf16.msra.mxu0 %v730
  %782 = vmatprep.subr.bf16.mxu0 0
  %783 = vmatpush1.bf16.msra.mxu0 %v731
  %784 = vmatprep.subr.bf16.mxu0 0
  %785 = vmatpush1.bf16.msra.mxu0 %v732
  %786 = vmatprep.subr.bf16.mxu0 0
  %787 = vmatpush1.bf16.msra.mxu0 %v733
  %788 = vmatprep.subr.bf16.mxu0 0
  %789 = vmatpush1.bf16.msra.mxu0 %v734
  %790 = vmatprep.subr.bf16.mxu0 0
  %791 = vmatpush1.bf16.msra.mxu0 %v735
  %792 = vmatprep.subr.bf16.mxu0 0
  %793 = vmatpush1.bf16.msra.mxu0 %v736
  %794 = vmatprep.subr.bf16.mxu0 0
  %795 = vmatpush1.bf16.msra.mxu0 %v737
  %796 = vmatprep.subr.bf16.mxu0 0
  %797 = vmatpush1.bf16.msra.mxu0 %v738
  %798 = vmatprep.subr.bf16.mxu0 0
  %799 = vmatpush1.bf16.msra.mxu0 %v739
  %800 = vmatprep.subr.bf16.mxu0 0
  %801 = vmatpush1.bf16.msra.mxu0 %v740
  %802 = vmatprep.subr.bf16.mxu0 0
  %803 = vmatpush1.bf16.msra.mxu0 %v741
  %804 = vmatprep.subr.bf16.mxu0 0
  %805 = vmatpush1.bf16.msra.mxu0 %v742
  %806 = vmatprep.subr.bf16.mxu0 0
  %807 = vmatpush1.bf16.msra.mxu0 %v743
  %808 = vmatprep.mubr.bf16.mxu0 %v579
  %809 = vmatmul.mubr.bf16.gmra.mrb[0].mxu0 %v578
  %v810 = vpop.f32.mrb[0].mxu0
  %v811 = vadd.f32 0.0, %v810
  %v812 = vpop.f32.mrb[0].mxu0
  %v813 = vpop.f32.mrb[0].mxu0
  %v814 = vadd.f32 0.0, %v813
  %v815 = vpop.f32.mrb[0].mxu0
  %816 = vmatprep.mubr.bf16.mxu0 %v582
  %817 = vmatmul.mubr.bf16.gmra.mrb[0].mxu0 %v581
  %v818 = vpop.f32.mrb[0].mxu0
  %v819 = vadd.f32 0.0, %v818
  %v820 = vpop.f32.mrb[0].mxu0
  %v821 = vpop.f32.mrb[0].mxu0
  %v822 = vadd.f32 0.0, %v821
  %v823 = vpop.f32.mrb[0].mxu0
  %824 = vdwg.mxu0
  %825 = vmatprep.subr.bf16.mxu0 0
  %826 = vmatpush1.bf16.msra.mxu0 %v744
  %827 = vmatprep.subr.bf16.mxu0 0
  %828 = vmatpush1.bf16.msra.mxu0 %v745
  %829 = vmatprep.subr.bf16.mxu0 0
  %830 = vmatpush1.bf16.msra.mxu0 %v746
  %831 = vmatprep.subr.bf16.mxu0 0
  %832 = vmatpush1.bf16.msra.mxu0 %v747
  %833 = vmatprep.subr.bf16.mxu0 0
  %834 = vmatpush1.bf16.msra.mxu0 %v748
  %835 = vmatprep.subr.bf16.mxu0 0
  %836 = vmatpush1.bf16.msra.mxu0 %v749
  %837 = vmatprep.subr.bf16.mxu0 0
  %838 = vmatpush1.bf16.msra.mxu0 %v750
  %839 = vmatprep.subr.bf16.mxu0 0
  %840 = vmatpush1.bf16.msra.mxu0 %v751
  %841 = vmatprep.subr.bf16.mxu0 0
  %842 = vmatpush1.bf16.msra.mxu0 0
  %843 = vmatprep.subr.bf16.mxu0 0
  %844 = vmatpush1.bf16.msra.mxu0 0
  %845 = vmatprep.subr.bf16.mxu0 0
  %846 = vmatpush1.bf16.msra.mxu0 0
  %847 = vmatprep.subr.bf16.mxu0 0
  %848 = vmatpush1.bf16.msra.mxu0 0
  %849 = vmatprep.subr.bf16.mxu0 0
  %850 = vmatpush1.bf16.msra.mxu0 0
  %851 = vmatprep.subr.bf16.mxu0 0
  %852 = vmatpush1.bf16.msra.mxu0 0
  %853 = vmatprep.subr.bf16.mxu0 0
  %854 = vmatpush1.bf16.msra.mxu0 0
  %855 = vmatprep.subr.bf16.mxu0 0
  %856 = vmatpush1.bf16.msra.mxu0 0
  %857 = vmatprep.mubr.bf16.mxu0 0
  %858 = vmatmul.mubr.bf16.gmra.mrb[0].mxu0 %v580
  %v859 = vpop.f32.mrb[0].mxu0
  %v860 = vadd.f32 %v811, %v859
  %v861 = vpop.f32.mrb[0].mxu0
  %v862 = vpop.f32.mrb[0].mxu0
  %v863 = vadd.f32 %v814, %v862
  %v864 = vpop.f32.mrb[0].mxu0
  %865 = vmatprep.mubr.bf16.mxu0 0
  %866 = vmatmul.mubr.bf16.gmra.mrb[0].mxu0 %v583
  %v867 = vpop.f32.mrb[0].mxu0
  %v868 = vadd.f32 %v819, %v867
  %v869 = vpop.f32.mrb[0].mxu0
  %v870 = vpop.f32.mrb[0].mxu0
  %v871 = vadd.f32 %v822, %v870
  %v872 = vpop.f32.mrb[0].mxu0
  %873 = vdwg.mxu0
  %v874 = vadd.f32 %v860, %v863
  %v875 = vrot.slane %v874, 4
  %v876 = vadd.f32 %v874, %v875
  %v877 = vrot.slane %v876, 2
  %v878 = vadd.f32 %v876, %v877
  %v879 = vrot.slane %v878, 1
  %v880 = vadd.f32 %v878, %v879
  %v881 = vadd.f32 %v868, %v871
  %v882 = vrot.slane %v881, 4
  %v883 = vadd.f32 %v881, %v882
  %v884 = vrot.slane %v883, 2
  %v885 = vadd.f32 %v883, %v884
  %v886 = vrot.slane %v885, 1
  %v887 = vadd.f32 %v885, %v886
  %v888 = vmul.f32 %v860, %v860
  %v889 = vmul.f32 %v863, %v863
  %v890 = vmul.f32 %v868, %v868
  %v891 = vmul.f32 %v871, %v871
  %v892 = vadd.f32 %v888, %v889
  %v893 = vrot.slane %v892, 4
  %v894 = vadd.f32 %v892, %v893
  %v895 = vrot.slane %v894, 2
  %v896 = vadd.f32 %v894, %v895
  %v897 = vrot.slane %v896, 1
  %v898 = vadd.f32 %v896, %v897
  %v899 = vadd.f32 %v890, %v891
  %v900 = vrot.slane %v899, 4
  %v901 = vadd.f32 %v899, %v900
  %v902 = vrot.slane %v901, 2
  %v903 = vadd.f32 %v901, %v902
  %v904 = vrot.slane %v903, 1
  %v905 = vadd.f32 %v903, %v904
  %v908 = vsel %vm414, %v887, %v880
  %v912 = vsel %vm419, %v905, %v898
  %v914 = vsel %vm422, %v908, %v912
  %915 = vrot.lane.b32.xlu0 %v914, 8
  %v916 = vpop.permute.xlu0 %915
  %v917 = vadd.f32 %v914, %v916
  %918 = vrot.lane.b32.xlu0 %v917, 16
  %v919 = vpop.permute.xlu0 %918
  %v920 = vadd.f32 %v917, %v919
  %921 = vrot.lane.b32.xlu0 %v920, 32
  %v922 = vpop.permute.xlu0 %921
  %v923 = vadd.f32 %v920, %v922
  %924 = vrot.lane.b32.xlu0 %v923, 64
  %v925 = vpop.permute.xlu0 %924
  %v926 = vadd.f32 %v923, %v925
  %v927 = vmul.f32 %v926, 0.00390625
  %v928 = vmul.f32 %v927, %v927
  %v930 = vrot.slane %v928, 6
  %v932 = vsub.f32 %v927, %v930
  %v933 = vadd.f32 %v932, 1e-05
  %v934 = vrsqrt.pop %v933
  %v937 = vunpack.c.l.s4 1966171168
  %v938 = vunpack.c.0.s8 %v937
  %v939 = vlaneseq
  %v940 = vshrl.u32 %v939, 7
  %v941 = vsub.s32 %v938, %v940
  %v942 = vrot.slane %v927, %v941
  %v943 = vcombine.high %v942, %v942
  %v945 = vunpack.c.l.s4 1966171168
  %v946 = vunpack.c.0.s8 %v945
  %v947 = vlaneseq
  %v948 = vshrl.u32 %v947, 7
  %v949 = vsub.s32 %v946, %v948
  %v950 = vrot.slane %v942, %v949
  %v952 = vunpack.c.l.s4 1966171168
  %v953 = vunpack.c.0.s8 %v952
  %v954 = vlaneseq
  %v955 = vshrl.u32 %v954, 7
  %v956 = vsub.s32 %v953, %v955
  %v957 = vrot.slane %v943, %v956
  %v958 = vlaneseq
  %v959 = vshrl.u32 %v958, 7
  %v960 = vsub.s32 0, %v959
  %v961 = vrot.slane %v950, %v960
  %v962 = vlaneseq
  %v963 = vshrl.u32 %v962, 7
  %v964 = vsub.s32 0, %v963
  %v965 = vrot.slane %v957, %v964
  %v968 = vsub.f32 %v860, %v961
  %v969 = vsub.f32 %v863, %v961
  %v970 = vsub.f32 %v868, %v965
  %v971 = vsub.f32 %v871, %v965
  %v974 = vunpack.c.l.s4 1966171168
  %v975 = vunpack.c.0.s8 %v974
  %v976 = vlaneseq
  %v977 = vshrl.u32 %v976, 7
  %v978 = vsub.s32 %v975, %v977
  %v979 = vrot.slane %v934, %v978
  %v980 = vcombine.high %v979, %v979
  %v982 = vunpack.c.l.s4 1966171168
  %v983 = vunpack.c.0.s8 %v982
  %v984 = vlaneseq
  %v985 = vshrl.u32 %v984, 7
  %v986 = vsub.s32 %v983, %v985
  %v987 = vrot.slane %v979, %v986
  %v989 = vunpack.c.l.s4 1966171168
  %v990 = vunpack.c.0.s8 %v989
  %v991 = vlaneseq
  %v992 = vshrl.u32 %v991, 7
  %v993 = vsub.s32 %v990, %v992
  %v994 = vrot.slane %v980, %v993
  %v995 = vcombine.high %v987, %v987
  %v996 = vcombine.high %v994, %v994
  %v997 = vlaneseq
  %v998 = vshrl.u32 %v997, 7
  %v999 = vsub.s32 0, %v998
  %v1000 = vrot.slane %v995, %v999
  %v1001 = vlaneseq
  %v1002 = vshrl.u32 %v1001, 7
  %v1003 = vsub.s32 0, %v1002
  %v1004 = vrot.slane %v996, %v1003
  %v1007 = vmul.f32 %v968, %v1000
  %v1008 = vmul.f32 %v969, %v1000
  %v1009 = vmul.f32 %v970, %v1004
  %v1010 = vmul.f32 %v971, %v1004
  %v1011 = vadd.f32 %v15, %v1007
  %v1012 = vadd.f32 %v16, %v1008
  %v1013 = vadd.f32 %v17, %v1009
  %v1014 = vadd.f32 %v18, %v1010
  %1015 = vst [vmem:[%s3] sm:$0xff] %v1011
  %1016 = vst [vmem:[%s3 + $0x8] sm:$0xff] %v1012
  %1017 = vst [vmem:[%s3 + $0x10] sm:$0xff] %v1013
  %1018 = vst [vmem:[%s3 + $0x18] sm:$0xff] %v1014
  // Predicated region
  $region14: #{resnet_block_forward.1} parent=0 // pred_check
    _
  $region15: #{resnet_block_forward.1} parent=0 // pred_check_branch
    %1020 = sbr.rel (0) target = $region17
  $region16: #{resnet_block_forward.1} parent=0 // pred_region
    _
  $region17: #{resnet_block_forward.1} parent=0 // pred_fallthru
    _
  // Predicated region
  $region18: #{resnet_block_forward.1} parent=0 // pred_check
    _
  $region19: #{resnet_block_forward.1} parent=0 // pred_check_branch
    %1022 = sbr.rel (0) target = $region21
  $region20: #{resnet_block_forward.1} parent=0 // pred_region
    _
  $region21: #{resnet_block_forward.1} parent=0 // pred_fallthru
    _

</llo_original>
